<compile_context>
chip_gen: v6e
topology: v6e:2x2x1
jax: 0.10.0
libtpu: 0.0.40
codegen_flags: <defaults>
</compile_context>

<pallas_src>
import functools

import jax
import jax.numpy as jnp
from jax.experimental import pallas as pl
from jax.experimental.pallas import tpu as pltpu


# Neutral logit: exp(-|x|) == 0, sigmoid == 0, max(x,0) == 0, log1p(0) == 0 and
# t == 0, so padded / masked elements contribute exactly zero to every sum.
_NEUTRAL_LOGIT = -1e4


def _dice_bce_partial_kernel(x_ref, t_ref, o_ref, *, rows, block_rows, k_per,
                             needs_mask):
    """Accumulate per-channel partial sums for one (batch, split, chunk) block.

    x_ref, t_ref: (C, R, 128) logits / targets.
    o_ref:        (4*C, 128) resident accumulator:
                  rows [0:C)=sum(p*t), [C:2C)=sum(p), [2C:3C)=sum(t),
                  [3C:4C)=sum(bce).  Cross-lane reduce is deferred to wrapper.
    """
    k = pl.program_id(2)

    @pl.when(k == 0)
    def _():
        o_ref[...] = jnp.zeros_like(o_ref)

    x = x_ref[...].astype(jnp.float32)   # (C, R, 128)
    t = t_ref[...].astype(jnp.float32)

    def accumulate(xv, tv):
        # One shared exp feeds both sigmoid and the stable-BCE log term.
        e = jnp.exp(-jnp.abs(xv))                       # EUP exp
        inv = pl.reciprocal(1.0 + e, approx=True)       # EUP approx recip
        p = jnp.where(xv >= 0, 1.0, e) * inv            # == sigmoid(xv)
        # Numerically stable BCE-with-logits:
        #   -(t*log(p) + (1-t)*log(1-p)) == max(x,0) - t*x + log1p(exp(-|x|))
        bce = jnp.maximum(xv, 0.0) - tv * xv + jnp.log1p(e)
        # Sublane/row partial sums only; single full-tile accumulator RMW.
        o_ref[...] += jnp.concatenate(
            [jnp.sum(p * tv, axis=1),
             jnp.sum(p, axis=1),
             jnp.sum(tv, axis=1),
             jnp.sum(bce, axis=1)], axis=0)

    if needs_mask:
        chunk = pl.program_id(1) * k_per + k            # global row-chunk index
        is_tail = (chunk + 1) * block_rows > rows       # ragged or fully-OOB

        @pl.when(jnp.logical_not(is_tail))
        def _():
            accumulate(x, t)

        @pl.when(is_tail)
        def _():
            row_ids = jax.lax.broadcasted_iota(jnp.int32, (1, block_rows, 1), 1)
            valid = (chunk * block_rows + row_ids) < rows
            accumulate(jnp.where(valid, x, jnp.float32(_NEUTRAL_LOGIT)),
                       jnp.where(valid, t, 0.0))
    else:
        accumulate(x, t)


def dice_bce_loss(inputs, targets, smooth=1.0, classification=False,
                  block_bytes=None):
    """Pallas implementation of DiceBCELoss.forward.  Returns a scalar f32."""
    smooth = float(smooth)

    if classification:
        if inputs.ndim != 2:
            # TODO(synk): higher-rank classification inputs keep extra dims in torch.
            raise NotImplementedError("classification path supports rank-2 inputs")
        B, L0 = inputs.shape
        # Torch-batch rows become the grid batch axis; one "channel" per block.
        x3 = inputs.reshape(B, 1, L0)
        t3 = targets.reshape(B, 1, L0)
    else:
        N0, C0, H, W = inputs.shape   # torch module assumes C0 == 4
        # Contiguous reshape only -- no HBM transpose.
        x3 = inputs.reshape(N0, C0, H * W)
        t3 = targets.reshape(N0, C0, H * W)

    N, C, L = x3.shape
    n_valid = L if classification else N * L   # elements per reduction group

    # Lane padding fallback (only when L % 128 != 0; typical segmentation
    # spatial sizes need none).
    # TODO(synk): handle the lane tail in-kernel to avoid this extra HBM copy.
    if L % 128 != 0:
        pad = 128 - (L % 128)
        x3 = jnp.pad(x3, ((0, 0), (0, 0), (0, pad)),
                     constant_values=_NEUTRAL_LOGIT)
        t3 = jnp.pad(t3, ((0, 0), (0, 0), (0, pad)), constant_values=0.0)
        L = L + pad

    rows = L // 128
    x4 = x3.reshape(N, C, rows, 128)
    t4 = t3.reshape(N, C, rows, 128)

    # Generation-aware VMEM budget (v7x: 64 MiB, v5e/v6e: 128 MiB).
    try:
        vmem_cap = int(pltpu.get_tpu_info().vmem_capacity_bytes)
    except Exception:
        vmem_cap = 64 * 1024 * 1024          # conservative (v7x) fallback
    vmem_budget = int(vmem_cap * 0.75)
    if block_bytes is None:
        # 2 inputs x 2 pipeline buffers per block + headroom.
        block_bytes = max(1 << 20, min(16 << 20, vmem_budget // 6))

    itemsize = x4.dtype.itemsize
    bytes_per_row = C * 128 * itemsize
    r_target = max(8, (block_bytes // bytes_per_row) // 8 * 8)

    if rows <= r_target:
        R = rows                              # full reduction axis in one block
    else:
        R = r_target
        # Prefer a divisor of `rows` (multiple of 8) so masking is never traced.
        for cand in range(r_target, max(8, r_target // 2) - 1, -8):
            if rows % cand == 0:
                R = cand
                break
    K_total = pl.cdiv(rows, R)

    # v7x dual-TensorCore: also split the row-chunk axis when the batch axis
    # alone cannot fill both cores (N == 1 or odd N).
    S = 2 if (N % 2 == 1 and K_total >= 2) else 1
    K_per = pl.cdiv(K_total, S)
    needs_mask = (S * K_per * R) != rows

    kernel = functools.partial(_dice_bce_partial_kernel, rows=rows,
                               block_rows=R, k_per=K_per, needs_mask=needs_mask)

    max_blk = K_total - 1

    def in_map(n, s, k):
        blk = s * K_per + k
        if S > 1 and S * K_per > K_total:
            blk = jnp.minimum(blk, max_blk)   # never issue a fully-OOB DMA
        return (n, 0, blk, 0)

    partials = pl.pallas_call(
        kernel,
        out_shape=jax.ShapeDtypeStruct((N, S, 4 * C, 128), jnp.float32),
        grid_spec=pltpu.PrefetchScalarGridSpec(
            num_scalar_prefetch=0,
            grid=(N, S, K_per),
            in_specs=[
                pl.BlockSpec((None, C, R, 128), in_map),
                pl.BlockSpec((None, C, R, 128), in_map),
            ],
            out_specs=pl.BlockSpec((None, None, 4 * C, 128),
                                   lambda n, s, k: (n, s, 0, 0)),
        ),
        compiler_params=pltpu.CompilerParams(
            dimension_semantics=("parallel", "parallel", "arbitrary"),
            vmem_limit_bytes=vmem_budget,
        ),
    )(x4, t4)

    # Tiny epilogue: finish cross-lane / cross-split sums and scalar Dice/BCE.
    per_nc = jnp.sum(partials.reshape(N, S, 4, C, 128), axis=(1, 4))  # (N,4,C)
    if classification:
        group_sums = per_nc[:, :, 0]                        # (B, 4): per row
    else:
        group_sums = jnp.transpose(jnp.sum(per_nc, axis=0))  # (C, 4): per chan

    inter, p_sum = group_sums[:, 0], group_sums[:, 1]
    t_sum, bce_sum = group_sums[:, 2], group_sums[:, 3]
    dice_loss = 1.0 - (2.0 * inter + smooth) / (p_sum + t_sum + smooth)
    bce = bce_sum / n_valid
    return jnp.mean(bce + dice_loss)


def _dice_bce_ref(inputs, targets, smooth=1.0, classification=False):
    """Pure-JAX mirror of the PyTorch DiceBCELoss.forward."""
    p = jax.nn.sigmoid(inputs.astype(jnp.float32))
    t = targets.astype(jnp.float32)
    if not classification:
        C = inputs.shape[1]
        p = jnp.transpose(p, (1, 0, 2, 3)).reshape(C, -1)
        t = jnp.transpose(t, (1, 0, 2, 3)).reshape(C, -1)
    inter = jnp.sum(p * t, axis=1)
    dice_loss = 1.0 - (2.0 * inter + smooth) / (
        jnp.sum(p, axis=1) + jnp.sum(t, axis=1) + smooth)
    bce_el = -(t * jnp.log(p) + (1.0 - t) * jnp.log(1.0 - p))
    bce = jnp.mean(bce_el, axis=1)
    return jnp.mean(bce + dice_loss)


if __name__ == "__main__":
    key = jax.random.PRNGKey(0)
    ks = jax.random.split(key, 10)
    TOL = dict(rtol=2e-3, atol=2e-3)   # approx-reciprocal in the kernel

    # 1) Segmentation path: batch=2, channels=4 (module hard-codes 4), 16x16.
    x = jax.random.normal(ks[0], (2, 4, 16, 16), dtype=jnp.float32)
    t = (jax.random.uniform(ks[1], (2, 4, 16, 16)) > 0.5).astype(jnp.float32)
    got = jax.block_until_ready(dice_bce_loss(x, t, smooth=1.0))
    want = _dice_bce_ref(x, t, smooth=1.0)
    assert jnp.allclose(got, want, **TOL), (got, want)

    # 2) Multi-chunk + ragged row tail (tiny block_bytes forces K>1 + mask).
    x2 = jax.random.normal(ks[2], (2, 4, 10, 128), dtype=jnp.float32)
    t2 = (jax.random.uniform(ks[3], (2, 4, 10, 128)) > 0.5).astype(jnp.float32)
    got2 = jax.block_until_ready(
        dice_bce_loss(x2, t2, smooth=1.0, block_bytes=16 * 1024))
    want2 = _dice_bce_ref(x2, t2, smooth=1.0)
    assert jnp.allclose(got2, want2, **TOL), (got2, want2)

    # 3) N=1 -> 2-way row-chunk split (dual-core path) with clamped OOB chunk.
    x3 = jax.random.normal(ks[4], (1, 4, 24, 128), dtype=jnp.float32)
    t3 = (jax.random.uniform(ks[5], (1, 4, 24, 128)) > 0.5).astype(jnp.float32)
    got3 = jax.block_until_ready(
        dice_bce_loss(x3, t3, smooth=1.0, block_bytes=16 * 1024))
    want3 = _dice_bce_ref(x3, t3, smooth=1.0)
    assert jnp.allclose(got3, want3, **TOL), (got3, want3)

    # 4) Classification path: (batch=4, features=200) exercises lane padding.
    x4c = jax.random.normal(ks[6], (4, 200), dtype=jnp.float32)
    t4c = (jax.random.uniform(ks[7], (4, 200)) > 0.5).astype(jnp.float32)
    got4 = jax.block_until_ready(
        dice_bce_loss(x4c, t4c, smooth=1.0, classification=True))
    want4 = _dice_bce_ref(x4c, t4c, smooth=1.0, classification=True)
    assert jnp.allclose(got4, want4, **TOL), (got4, want4)

    # 5) bf16 inputs/targets (half the HBM bytes; compute stays f32 in-kernel).
    xb = jax.random.normal(ks[8], (2, 4, 16, 16), dtype=jnp.bfloat16)
    tb = (jax.random.uniform(ks[9], (2, 4, 16, 16)) > 0.5).astype(jnp.bfloat16)
    got5 = jax.block_until_ready(dice_bce_loss(xb, tb, smooth=1.0))
    want5 = _dice_bce_ref(xb, tb, smooth=1.0)
    assert jnp.allclose(got5, want5, rtol=5e-3, atol=5e-3), (got5, want5)

    print("KERNEL_OK")
</pallas_src>

<mosaic_0001>
module attributes {stable_mosaic.version = 11 : i64} {
  func.func @_dice_bce_partial_kernel(%arg0: i32, %arg1: i32, %arg2: i32, %arg3: memref<1x4x2x128xf32, #tpu.memory_space<vmem>>, %arg4: memref<1x4x2x128xf32, #tpu.memory_space<vmem>>, %arg5: memref<1x1x16x128xf32, #tpu.memory_space<vmem>>) attributes {dimension_semantics = [#tpu.dimension_semantics<parallel>, #tpu.dimension_semantics<parallel>, #tpu.dimension_semantics<arbitrary>], iteration_bounds = array<i64: 2, 1, 1>, scalar_prefetch = 0 : i64, scratch_operands = 0 : i64, tpu.core_type = #tpu.core_type<tc>, window_params = [{transform_indices = @transform_0, window_bounds = array<i64: 1, 4, 2, 128>}, {transform_indices = @transform_1, window_bounds = array<i64: 1, 4, 2, 128>}, {transform_indices = @transform_2, window_bounds = array<i64: 1, 1, 16, 128>}]} {
    %c0_i32 = arith.constant 0 : i32
    %0 = arith.cmpi eq, %arg2, %c0_i32 : i32
    %1 = arith.extui %0 : i1 to i32
    %c0_i32_0 = arith.constant 0 : i32
    %2 = arith.cmpi ne, %1, %c0_i32_0 : i32
    scf.if %2 {
      %cst_24 = arith.constant 0.000000e+00 : f32
      %37 = vector.broadcast %cst_24 : f32 to vector<16x128xf32>
      %c0_25 = arith.constant 0 : index
      %c0_26 = arith.constant 0 : index
      %c0_27 = arith.constant 0 : index
      %c0_28 = arith.constant 0 : index
      %38 = vector.load %arg5[%c0_25, %c0_26, %c0_27, %c0_28] : memref<1x1x16x128xf32, #tpu.memory_space<vmem>>, vector<1x1x16x128xf32>
      %39 = vector.shape_cast %38 : vector<1x1x16x128xf32> to vector<16x128xf32>
      %40 = vector.shape_cast %37 : vector<16x128xf32> to vector<1x1x16x128xf32>
      tpu.vector_store %arg5[%c0_25, %c0_26, %c0_27, %c0_28], %40 {strides = array<i32>} : memref<1x1x16x128xf32, #tpu.memory_space<vmem>>, vector<1x1x16x128xf32>,
    } else {
    }
    %c0 = arith.constant 0 : index
    %c0_1 = arith.constant 0 : index
    %c0_2 = arith.constant 0 : index
    %c0_3 = arith.constant 0 : index
    %3 = vector.load %arg3[%c0, %c0_1, %c0_2, %c0_3] : memref<1x4x2x128xf32, #tpu.memory_space<vmem>>, vector<1x4x2x128xf32>
    %4 = vector.shape_cast %3 : vector<1x4x2x128xf32> to vector<4x2x128xf32>
    %c0_4 = arith.constant 0 : index
    %c0_5 = arith.constant 0 : index
    %c0_6 = arith.constant 0 : index
    %c0_7 = arith.constant 0 : index
    %5 = vector.load %arg4[%c0_4, %c0_5, %c0_6, %c0_7] : memref<1x4x2x128xf32, #tpu.memory_space<vmem>>, vector<1x4x2x128xf32>
    %6 = vector.shape_cast %5 : vector<1x4x2x128xf32> to vector<4x2x128xf32>
    %7 = math.absf %4 : vector<4x2x128xf32>
    %cst = arith.constant 0.000000e+00 : f32
    %8 = vector.broadcast %cst : f32 to vector<4x2x128xf32>
    %9 = arith.subf %8, %7 : vector<4x2x128xf32>
    %10 = math.exp %9 : vector<4x2x128xf32>
    %cst_8 = arith.constant 1.000000e+00 : f32
    %11 = vector.broadcast %cst_8 : f32 to vector<4x2x128xf32>
    %12 = arith.addf %11, %10 : vector<4x2x128xf32>
    %13 = tpu.reciprocal %12 {approx = true} : vector<4x2x128xf32> -> vector<4x2x128xf32>
    %cst_9 = arith.constant 0.000000e+00 : f32
    %14 = vector.broadcast %cst_9 : f32 to vector<4x2x128xf32>
    %15 = arith.cmpf oge, %4, %14 : vector<4x2x128xf32>
    %cst_10 = arith.constant 1.000000e+00 : f32
    %16 = vector.broadcast %cst_10 : f32 to vector<4x2x128xf32>
    %17 = arith.select %15, %16, %10 : vector<4x2x128xi1>, vector<4x2x128xf32>
    %18 = arith.mulf %17, %13 : vector<4x2x128xf32>
    %cst_11 = arith.constant 0.000000e+00 : f32
    %19 = vector.broadcast %cst_11 : f32 to vector<4x2x128xf32>
    %20 = arith.maximumf %4, %19 : vector<4x2x128xf32>
    %21 = arith.mulf %6, %4 : vector<4x2x128xf32>
    %22 = arith.subf %20, %21 : vector<4x2x128xf32>
    %23 = math.log1p %10 : vector<4x2x128xf32>
    %24 = arith.addf %22, %23 : vector<4x2x128xf32>
    %c0_12 = arith.constant 0 : index
    %c0_13 = arith.constant 0 : index
    %c0_14 = arith.constant 0 : index
    %c0_15 = arith.constant 0 : index
    %25 = vector.load %arg5[%c0_12, %c0_13, %c0_14, %c0_15] : memref<1x1x16x128xf32, #tpu.memory_space<vmem>>, vector<1x1x16x128xf32>
    %26 = vector.shape_cast %25 : vector<1x1x16x128xf32> to vector<16x128xf32>
    %27 = arith.mulf %18, %6 : vector<4x2x128xf32>
    %cst_16 = arith.constant dense<0.000000e+00> : vector<4x128xf32>
    %28 = vector.multi_reduction <add>, %27, %cst_16 [1] : vector<4x2x128xf32> to vector<4x128xf32>
    %cst_17 = arith.constant dense<0.000000e+00> : vector<4x128xf32>
    %29 = vector.multi_reduction <add>, %18, %cst_17 [1] : vector<4x2x128xf32> to vector<4x128xf32>
    %cst_18 = arith.constant dense<0.000000e+00> : vector<4x128xf32>
    %30 = vector.multi_reduction <add>, %6, %cst_18 [1] : vector<4x2x128xf32> to vector<4x128xf32>
    %cst_19 = arith.constant dense<0.000000e+00> : vector<4x128xf32>
    %31 = vector.multi_reduction <add>, %24, %cst_19 [1] : vector<4x2x128xf32> to vector<4x128xf32>
    %32 = tpu.concatenate %28, %29, %30, %31 in 0 : vector<4x128xf32>, vector<4x128xf32>, vector<4x128xf32>, vector<4x128xf32> -> vector<16x128xf32>
    %33 = arith.addf %26, %32 : vector<16x128xf32>
    %c0_20 = arith.constant 0 : index
    %c0_21 = arith.constant 0 : index
    %c0_22 = arith.constant 0 : index
    %c0_23 = arith.constant 0 : index
    %34 = vector.load %arg5[%c0_20, %c0_21, %c0_22, %c0_23] : memref<1x1x16x128xf32, #tpu.memory_space<vmem>>, vector<1x1x16x128xf32>
    %35 = vector.shape_cast %34 : vector<1x1x16x128xf32> to vector<16x128xf32>
    %36 = vector.shape_cast %33 : vector<16x128xf32> to vector<1x1x16x128xf32>
    tpu.vector_store %arg5[%c0_20, %c0_21, %c0_22, %c0_23], %36 {strides = array<i32>} : memref<1x1x16x128xf32, #tpu.memory_space<vmem>>, vector<1x1x16x128xf32>,
    return
  }
  func.func @transform_0(%arg0: i32, %arg1: i32, %arg2: i32) -> (i32, i32, i32, i32) {
    %c1_i32 = arith.constant 1 : i32
    %0 = arith.muli %arg1, %c1_i32 : i32
    %1 = arith.addi %0, %arg2 : i32
    %c0_i32 = arith.constant 0 : i32
    %c0_i32_0 = arith.constant 0 : i32
    %c0_i32_1 = arith.constant 0 : i32
    return %arg0, %c0_i32, %1, %c0_i32_0 : i32, i32, i32, i32
  }
  func.func @transform_1(%arg0: i32, %arg1: i32, %arg2: i32) -> (i32, i32, i32, i32) {
    %c1_i32 = arith.constant 1 : i32
    %0 = arith.muli %arg1, %c1_i32 : i32
    %1 = arith.addi %0, %arg2 : i32
    %c0_i32 = arith.constant 0 : i32
    %c0_i32_0 = arith.constant 0 : i32
    %c0_i32_1 = arith.constant 0 : i32
    return %arg0, %c0_i32, %1, %c0_i32_0 : i32, i32, i32, i32
  }
  func.func @transform_2(%arg0: i32, %arg1: i32, %arg2: i32) -> (i32, i32, i32, i32) {
    %c0_i32 = arith.constant 0 : i32
    %c0_i32_0 = arith.constant 0 : i32
    %c0_i32_1 = arith.constant 0 : i32
    return %arg0, %arg1, %c0_i32, %c0_i32_0 : i32, i32, i32, i32
  }
}

</mosaic_0001>

<llo_original>
// kernel: tpu_custom_call.1
$region0: #{tpu_custom_call.1}
  #allocation0 [shape = 'u32[]', space=smem, size = 0x4, offset = 0x4, fixed_abs, tag = 'smem constant byte address 0x4 - core index']
  #allocation1 [shape = 'u32[144,128]{1,0:T(1,128)}', space=vmem, size = 0x12000, scoped, tag = 'internal scratch']
  %s0 = inlined_call_operand.hbm [shape: f32[2,4,2,128], index: 0, kind: input, shape index: {}]
  %s1 = inlined_call_operand.hbm [shape: f32[2,4,2,128], index: 1, kind: input, shape index: {}]
  %s2 = inlined_call_operand.hbm [shape: f32[2,1,16,128], index: 2, kind: output, shape index: {}]
  %s3 = sld [smem:[#allocation0]]
  $region53: #{tpu_custom_call.1} parent=0
    _
  %s5 = ssub.s32 1, %s3
  %s6 = scalar_select 0, %s5, %s3
  $region1: #{tpu_custom_call.1} parent=0
    #allocation2 [shape = 'u8[8192]{0}', space=vmem, size = 0x2000, scoped, tag = 'input window, operand 0']
    #allocation3 [shape = 's32[2]{0}', space=sflag, size = 0x8, scoped, tag = 'scoped memory for tpu_custom_call.1']
    #allocation4 [shape = 's32[2]{0}', space=sflag, size = 0x8, scoped, tag = 'scoped memory for tpu_custom_call.1']
    #allocation5 [shape = 'u8[8192]{0}', space=vmem, size = 0x2000, scoped, tag = 'input window, operand 1']
    #allocation6 [shape = 's32[2]{0}', space=sflag, size = 0x8, scoped, tag = 'scoped memory for tpu_custom_call.1']
    #allocation7 [shape = 'u8[16384]{0}', space=vmem, size = 0x4000, scoped, tag = 'output window, operand 0']
    %7 = vsyncpa [#allocation3], 0
    %s8 = scalar_lea.sflag [#allocation3], 1
    %9 = vsyncpa %s8, 0
    %10 = vsyncpa [#allocation6], 0
    %s11 = scalar_lea.sflag [#allocation6], 1
    %12 = vsyncpa %s11, 0
    %13 = vsyncpa [#allocation4], 0
    %s14 = scalar_lea.sflag [#allocation4], 1
    %15 = vsyncpa %s14, 0
    loop: start=0, step=1, limit=4
    $region2: #{tpu_custom_call.1} parent=1 // loop_pre_header
      _
    $region3: #{tpu_custom_call.1} parent=1 // loop_header
      %s17 = sphi 0, %s21
      %p18 = scmp.ge.s32.totalorder %s17, 4
      %s24 = sphi 0, %s43
      %s25 = sphi 0, %s39
      %s26 = sphi 0, %s35
      %s27 = sphi 0, %s24
      %s28 = sphi 0, %s25
      %s29 = sphi 0, %s26
      %s30 = sphi 0, %s27
      %s31 = sphi 0, %s28
      %s32 = sphi 0, %s29
      %s50 = sphi 0, %s52
      %s53 = sphi 0, %s50
      %s54 = sphi 0, %s53
      %s70 = sphi 0, %s54
      %s80 = sphi 0, %s82
      %s83 = sphi 0, %s80
      %s84 = sphi 0, %s83
      %s100 = sphi 0, %s84
      %s108 = sphi 0, %s110
      %s111 = sphi 0, %s108
      %s112 = sphi 0, %s111
      %s128 = sphi 0, %s112
    $region4: #{tpu_custom_call.1} parent=1 // loop_header_branch
      %20 = sbr.rel (%p18) target = $region8
    $region5: #{tpu_custom_call.1} parent=1 // loop_body
      %s22 = ssub.s32 %s17, 1
      %s23 = ssub.s32 %s17, 2
      %s33 = sadd.s32 1, %s26
      %p34 = scmp.ge.s32.totalorder %s33, 1
      %s35 = scalar_select %p34, 0, %s33
      %s36 = sadd.s32 1, %s25
      %s37 = scalar_select %p34, %s36, %s25
      %p38 = scmp.ge.s32.totalorder %s37, 1
      %s39 = scalar_select %p38, 0, %s37
      %s40 = sadd.s32 1, %s24
      %s41 = scalar_select %p38, %s40, %s24
      %p42 = scmp.ge.s32.totalorder %s41, 2
      %s43 = scalar_select %p42, 0, %s41
      %s44 = sadd.s32 %s25, %s26
      %s45 = sadd.s32 %s39, %s35
      %s46 = ssub.s32 %s24, %s43
      %s47 = ssub.s32 %s44, %s45
      %s48 = sor.u32 %s46, %s47
      %p49 = scmp.eq.s32.totalorder %s48, 0
      %s51 = sadd.s32 %s50, 1
      %s52 = scalar_select %p49, %s50, %s51
      %p55 = pneg %p49
      %p56 = scmp.eq.s32.totalorder %s17, 1
      %p57 = por %p55, %p56
      %p58 = scmp.ne.s32.totalorder %s50, %s53
      %p59 = scmp.eq.s32.totalorder %s17, 0
      %p60 = por %p58, %p59
      %p61 = scmp.ne.s32.totalorder %s50, %s53
      %p62 = scmp.eq.s32.totalorder %s22, 1
      %p63 = por %p61, %p62
      %p64 = scmp.ne.s32.totalorder %s53, %s54
      %p65 = scmp.eq.s32.totalorder %s22, 0
      %p66 = por %p64, %p65
      %p67 = scmp.ne.s32.totalorder %s53, %s54
      %p68 = scmp.eq.s32.totalorder %s23, 1
      %p69 = por %p67, %p68
      %p71 = scmp.ne.s32.totalorder %s54, %s70
      %p72 = scmp.eq.s32.totalorder %s23, 0
      %p73 = por %p71, %p72
      %s74 = sadd.s32 %s25, %s26
      %s75 = sadd.s32 %s39, %s35
      %s76 = ssub.s32 %s24, %s43
      %s77 = ssub.s32 %s74, %s75
      %s78 = sor.u32 %s76, %s77
      %p79 = scmp.eq.s32.totalorder %s78, 0
      %s81 = sadd.s32 %s80, 1
      %s82 = scalar_select %p79, %s80, %s81
      %p85 = pneg %p79
      %p86 = scmp.eq.s32.totalorder %s17, 1
      %p87 = por %p85, %p86
      %p88 = scmp.ne.s32.totalorder %s80, %s83
      %p89 = scmp.eq.s32.totalorder %s17, 0
      %p90 = por %p88, %p89
      %p91 = scmp.ne.s32.totalorder %s80, %s83
      %p92 = scmp.eq.s32.totalorder %s22, 1
      %p93 = por %p91, %p92
      %p94 = scmp.ne.s32.totalorder %s83, %s84
      %p95 = scmp.eq.s32.totalorder %s22, 0
      %p96 = por %p94, %p95
      %p97 = scmp.ne.s32.totalorder %s83, %s84
      %p98 = scmp.eq.s32.totalorder %s23, 1
      %p99 = por %p97, %p98
      %p101 = scmp.ne.s32.totalorder %s84, %s100
      %p102 = scmp.eq.s32.totalorder %s23, 0
      %p103 = por %p101, %p102
      %s104 = ssub.s32 %s24, %s43
      %s105 = ssub.s32 %s25, %s39
      %s106 = sor.u32 %s104, %s105
      %p107 = scmp.eq.s32.totalorder %s106, 0
      %s109 = sadd.s32 %s108, 1
      %s110 = scalar_select %p107, %s108, %s109
      %p113 = pneg %p107
      %p114 = scmp.eq.s32.totalorder %s17, 1
      %p115 = por %p113, %p114
      %p116 = scmp.ne.s32.totalorder %s108, %s111
      %p117 = scmp.eq.s32.totalorder %s17, 0
      %p118 = por %p116, %p117
      %p119 = scmp.ne.s32.totalorder %s108, %s111
      %p120 = scmp.eq.s32.totalorder %s22, 1
      %p121 = por %p119, %p120
      %p122 = scmp.ne.s32.totalorder %s111, %s112
      %p123 = scmp.eq.s32.totalorder %s22, 0
      %p124 = por %p122, %p123
      %p125 = scmp.ne.s32.totalorder %s111, %s112
      %p126 = scmp.eq.s32.totalorder %s23, 1
      %p127 = por %p125, %p126
      %p129 = scmp.ne.s32.totalorder %s112, %s128
      %p130 = scmp.eq.s32.totalorder %s23, 0
      %p131 = por %p129, %p130
      %p132 = scmp.le.s32.totalorder 1, %s17
      %p133 = scmp.lt.s32.totalorder %s17, 3
      %p134 = pnand %p132, %p133
      %p135 = pneg %p134
      // Predicated region
      $region9: #{tpu_custom_call.1} parent=5 // pred_check
        _
      $region10: #{tpu_custom_call.1} parent=5 // pred_check_branch
        %137 = sbr.rel (%p134) target = $region12
      $region11: #{tpu_custom_call.1} parent=5 // pred_region
        %s138 = ssub.s32 %s17, 1
      $region12: #{tpu_custom_call.1} parent=5 // pred_fallthru
        _
      %p139 = scmp.lt.s32.totalorder %s17, 2
      // Predicated region
      $region13: #{tpu_custom_call.1} parent=5 // pred_check
        %p140 = pneg %p139
      $region14: #{tpu_custom_call.1} parent=5 // pred_check_branch
        %142 = sbr.rel (%p140) target = $region16
      $region15: #{tpu_custom_call.1} parent=5 // pred_region
        // Predicated region
        $region17: #{tpu_custom_call.1} parent=15 // pred_check
          %p143 = pneg %p60
        $region18: #{tpu_custom_call.1} parent=15 // pred_check_branch
          %145 = sbr.rel (%p143) target = $region20
        $region19: #{tpu_custom_call.1} parent=15 // pred_region
          %s146 = sand.u32 %s50, 1
          %s147 = scalar_lea.sflag [#allocation3], %s146
          %s148 = sand.u32 %s50, 1
          %s149 = smul.addr %s148, 8
          %s150 = scalar_lea.vmem [#allocation2], %s149
          %s151 = sadd.s32 %s25, %s26
          %s153 = ssub.s32 128, 128
          %154 = vsyncadd %s147, %s153
          %s155 = smul.addr %s24, 4
          %s156 = sadd.s32 %s151, %s155
          %s157 = smul.addr %s156, 32
          %s158 = scalar_lea.hbm %s0, %s157
          %s159 = sshll.u32 %s150, 4
          %s160 = int_to_ptr.vmem [resolvable:$true] %s159
          %165 = dma.hbm_to_vmem [thread:$0]  %s158, 128, %s160, %s147, 32, 32, 2
        $region20: #{tpu_custom_call.1} parent=15 // pred_fallthru
          _
        // Predicated region
        $region21: #{tpu_custom_call.1} parent=15 // pred_check
          %p166 = pneg %p90
        $region22: #{tpu_custom_call.1} parent=15 // pred_check_branch
          %168 = sbr.rel (%p166) target = $region24
        $region23: #{tpu_custom_call.1} parent=15 // pred_region
          %s169 = sand.u32 %s80, 1
          %s170 = scalar_lea.sflag [#allocation6], %s169
          %s171 = sand.u32 %s80, 1
          %s172 = smul.addr %s171, 8
          %s173 = scalar_lea.vmem [#allocation5], %s172
          %s174 = sadd.s32 %s25, %s26
          %s176 = ssub.s32 128, 128
          %177 = vsyncadd %s170, %s176
          %s178 = smul.addr %s24, 4
          %s179 = sadd.s32 %s174, %s178
          %s180 = smul.addr %s179, 32
          %s181 = scalar_lea.hbm %s1, %s180
          %s182 = sshll.u32 %s173, 4
          %s183 = int_to_ptr.vmem [resolvable:$true] %s182
          %188 = dma.hbm_to_vmem [thread:$0]  %s181, 128, %s183, %s170, 32, 32, 2
        $region24: #{tpu_custom_call.1} parent=15 // pred_fallthru
          _
      $region16: #{tpu_custom_call.1} parent=5 // pred_fallthru
        _
      %p189 = scmp.le.s32.totalorder 1, %s17
      %p190 = scmp.lt.s32.totalorder %s17, 3
      %p191 = pnand %p189, %p190
      %p192 = pneg %p191
      // Predicated region
      $region25: #{tpu_custom_call.1} parent=5 // pred_check
        _
      $region26: #{tpu_custom_call.1} parent=5 // pred_check_branch
        %194 = sbr.rel (%p191) target = $region28
      $region27: #{tpu_custom_call.1} parent=5 // pred_region
        %s195 = ssub.s32 %s17, 1
        %s196 = sand.u32 %s53, 1
        %s197 = scalar_lea.sflag [#allocation3], %s196
        %s198 = sand.u32 %s53, 1
        %s199 = smul.addr %s198, 8
        %s200 = scalar_lea.vmem [#allocation2], %s199
        // Predicated region
        $region29: #{tpu_custom_call.1} parent=27 // pred_check
          %p201 = pneg %p66
        $region30: #{tpu_custom_call.1} parent=27 // pred_check_branch
          %203 = sbr.rel (%p201) target = $region32
        $region31: #{tpu_custom_call.1} parent=27 // pred_region
          %204 = dma.done %s197, 128
        $region32: #{tpu_custom_call.1} parent=27 // pred_fallthru
          _
        %s205 = sand.u32 %s83, 1
        %s206 = scalar_lea.sflag [#allocation6], %s205
        %s207 = sand.u32 %s83, 1
        %s208 = smul.addr %s207, 8
        %s209 = scalar_lea.vmem [#allocation5], %s208
        // Predicated region
        $region33: #{tpu_custom_call.1} parent=27 // pred_check
          %p210 = pneg %p96
        $region34: #{tpu_custom_call.1} parent=27 // pred_check_branch
          %212 = sbr.rel (%p210) target = $region36
        $region35: #{tpu_custom_call.1} parent=27 // pred_region
          %213 = dma.done %s206, 128
        $region36: #{tpu_custom_call.1} parent=27 // pred_fallthru
          _
        %s214 = sand.u32 %s53, 1
        %s215 = scalar_lea.sflag [#allocation3], %s214
        %s216 = sand.u32 %s53, 1
        %s217 = smul.addr %s216, 8
        %s218 = scalar_lea.vmem [#allocation2], %s217
        %p219 = pneg %p66
        %p220 = pneg %p63
        %s221 = sand.u32 %s83, 1
        %s222 = scalar_lea.sflag [#allocation6], %s221
        %s223 = sand.u32 %s83, 1
        %s224 = smul.addr %s223, 8
        %s225 = scalar_lea.vmem [#allocation5], %s224
        %p226 = pneg %p96
        %p227 = pneg %p93
        %p228 = pneg %p124
        %p229 = pneg %p121
        %s230 = sand.u32 %s111, 1
        %s231 = scalar_lea.sflag [#allocation4], %s230
        %s232 = sand.u32 %s111, 1
        %s233 = smul.addr %s232, 16
        %s234 = scalar_lea.vmem [#allocation7], %s233
        %s235 = sadd.s32 %s28, %s29
        %s236 = sadd.s32 %s28, %s29
        %p237 = scmp.eq.s32.totalorder %s29, 0
        // Predicated region
        $region37: #{tpu_custom_call.1} parent=27 // pred_check
          %p238 = pneg %p237
        $region38: #{tpu_custom_call.1} parent=27 // pred_check_branch
          %240 = sbr.rel (%p238) target = $region40
        $region39: #{tpu_custom_call.1} parent=27 // pred_region
          %241 = vst [vmem:[%s234] sm:$0xff] 0.0
          %242 = vst [vmem:[%s234 + $0x8] sm:$0xff] 0.0
        $region40: #{tpu_custom_call.1} parent=27 // pred_fallthru
          _
        %v243 = vld [vmem:[%s200] sm:$0x3]
        %v244 = vld [vmem:[%s200 + $0x2] sm:$0x3]
        %v245 = vld [vmem:[%s200 + $0x4] sm:$0x3]
        %v246 = vld [vmem:[%s200 + $0x6] sm:$0x3]
        %v247 = vld [vmem:[%s209] sm:$0x3]
        %v248 = vld [vmem:[%s209 + $0x2] sm:$0x3]
        %v249 = vld [vmem:[%s209 + $0x4] sm:$0x3]
        %v250 = vld [vmem:[%s209 + $0x6] sm:$0x3]
        %v251 = vand.u32 2147483647, %v243
        %v252 = vand.u32 2147483647, %v244
        %v253 = vand.u32 2147483647, %v245
        %v254 = vand.u32 2147483647, %v246
        %v255 = vsub.f32 0.0, %v251
        %v256 = vsub.f32 0.0, %v252
        %v257 = vsub.f32 0.0, %v253
        %v258 = vsub.f32 0.0, %v254
        %v259 = vmul.f32 %v255, 1.442695
        %v260 = vpow.pop %v259
        %v261 = vmul.f32 %v256, 1.442695
        %v262 = vpow.pop %v261
        %v263 = vmul.f32 %v257, 1.442695
        %v264 = vpow.pop %v263
        %v265 = vmul.f32 %v258, 1.442695
        %v266 = vpow.pop %v265
        %v267 = vadd.f32 %v260, 1.0
        %v268 = vadd.f32 %v262, 1.0
        %v269 = vadd.f32 %v264, 1.0
        %v270 = vadd.f32 %v266, 1.0
        %v271 = vrcp.pop %v267
        %v272 = vrcp.pop %v268
        %v273 = vrcp.pop %v269
        %v274 = vrcp.pop %v270
        %vm275 = vcmp.ge.f32.partialorder %v243, 0.0
        %vm276 = vcmp.ge.f32.partialorder %v244, 0.0
        %vm277 = vcmp.ge.f32.partialorder %v245, 0.0
        %vm278 = vcmp.ge.f32.partialorder %v246, 0.0
        %v279 = vsel %vm275, 1.0, %v260
        %v280 = vsel %vm276, 1.0, %v262
        %v281 = vsel %vm277, 1.0, %v264
        %v282 = vsel %vm278, 1.0, %v266
        %v283 = vmul.f32 %v279, %v271
        %v284 = vmul.f32 %v280, %v272
        %v285 = vmul.f32 %v281, %v273
        %v286 = vmul.f32 %v282, %v274
        %v287 = vmax.f32 %v243, 0.0
        %v288 = vmax.f32 %v244, 0.0
        %v289 = vmax.f32 %v245, 0.0
        %v290 = vmax.f32 %v246, 0.0
        %v291 = vmul.f32 %v247, %v243
        %v292 = vmul.f32 %v248, %v244
        %v293 = vmul.f32 %v249, %v245
        %v294 = vmul.f32 %v250, %v246
        %v295 = vsub.f32 %v287, %v291
        %v296 = vsub.f32 %v288, %v292
        %v297 = vsub.f32 %v289, %v293
        %v298 = vsub.f32 %v290, %v294
        %v299 = vadd.f32 %v260, 1.0
        %v300 = vlog2.pop %v299
        %v301 = vmul.f32 %v300, 0.6931472
        %v302 = vmul.f32 -0.5, %v260
        %v303 = vadd.f32 %v302, 1.0
        %v304 = vmul.f32 %v303, %v260
        %v305 = vand.u32 2147483647, %v260
        %vm306 = vcmp.lt.f32.partialorder %v305, 0.0004427343
        %v307 = vsel %vm306, %v304, %v301
        %v308 = vadd.f32 %v262, 1.0
        %v309 = vlog2.pop %v308
        %v310 = vmul.f32 %v309, 0.6931472
        %v311 = vmul.f32 -0.5, %v262
        %v312 = vadd.f32 %v311, 1.0
        %v313 = vmul.f32 %v312, %v262
        %v314 = vand.u32 2147483647, %v262
        %vm315 = vcmp.lt.f32.partialorder %v314, 0.0004427343
        %v316 = vsel %vm315, %v313, %v310
        %v317 = vadd.f32 %v264, 1.0
        %v318 = vlog2.pop %v317
        %v319 = vmul.f32 %v318, 0.6931472
        %v320 = vmul.f32 -0.5, %v264
        %v321 = vadd.f32 %v320, 1.0
        %v322 = vmul.f32 %v321, %v264
        %v323 = vand.u32 2147483647, %v264
        %vm324 = vcmp.lt.f32.partialorder %v323, 0.0004427343
        %v325 = vsel %vm324, %v322, %v319
        %v326 = vadd.f32 %v266, 1.0
        %v327 = vlog2.pop %v326
        %v328 = vmul.f32 %v327, 0.6931472
        %v329 = vmul.f32 -0.5, %v266
        %v330 = vadd.f32 %v329, 1.0
        %v331 = vmul.f32 %v330, %v266
        %v332 = vand.u32 2147483647, %v266
        %vm333 = vcmp.lt.f32.partialorder %v332, 0.0004427343
        %v334 = vsel %vm333, %v331, %v328
        %v335 = vadd.f32 %v295, %v307
        %v336 = vadd.f32 %v296, %v316
        %v337 = vadd.f32 %v297, %v325
        %v338 = vadd.f32 %v298, %v334
        %v339 = vld [vmem:[%s234] sm:$0xff]
        %v340 = vld [vmem:[%s234 + $0x8] sm:$0xff]
        %v341 = vmul.f32 %v283, %v247
        %v342 = vmul.f32 %v284, %v248
        %v343 = vmul.f32 %v285, %v249
        %v344 = vmul.f32 %v286, %v250
        %vm345 = vcmask 1041408
        %v346 = vsel %vm345, %v341, 0.0
        %v347 = vrot.slane %v346, 4
        %v348 = vadd.f32 %v346, %v347
        %v349 = vrot.slane %v348, 2
        %v350 = vadd.f32 %v348, %v349
        %v351 = vrot.slane %v350, 1
        %v352 = vadd.f32 %v350, %v351
        %v353 = vsel %vm345, %v342, 0.0
        %v354 = vrot.slane %v353, 4
        %v355 = vadd.f32 %v353, %v354
        %v356 = vrot.slane %v355, 2
        %v357 = vadd.f32 %v355, %v356
        %v358 = vrot.slane %v357, 1
        %v359 = vadd.f32 %v357, %v358
        %v360 = vsel %vm345, %v343, 0.0
        %v361 = vrot.slane %v360, 4
        %v362 = vadd.f32 %v360, %v361
        %v363 = vrot.slane %v362, 2
        %v364 = vadd.f32 %v362, %v363
        %v365 = vrot.slane %v364, 1
        %v366 = vadd.f32 %v364, %v365
        %v367 = vsel %vm345, %v344, 0.0
        %v368 = vrot.slane %v367, 4
        %v369 = vadd.f32 %v367, %v368
        %v370 = vrot.slane %v369, 2
        %v371 = vadd.f32 %v369, %v370
        %v372 = vrot.slane %v371, 1
        %v373 = vadd.f32 %v371, %v372
        %v374 = vsel %vm345, %v283, 0.0
        %v375 = vrot.slane %v374, 4
        %v376 = vadd.f32 %v374, %v375
        %v377 = vrot.slane %v376, 2
        %v378 = vadd.f32 %v376, %v377
        %v379 = vrot.slane %v378, 1
        %v380 = vadd.f32 %v378, %v379
        %v381 = vsel %vm345, %v284, 0.0
        %v382 = vrot.slane %v381, 4
        %v383 = vadd.f32 %v381, %v382
        %v384 = vrot.slane %v383, 2
        %v385 = vadd.f32 %v383, %v384
        %v386 = vrot.slane %v385, 1
        %v387 = vadd.f32 %v385, %v386
        %v388 = vsel %vm345, %v285, 0.0
        %v389 = vrot.slane %v388, 4
        %v390 = vadd.f32 %v388, %v389
        %v391 = vrot.slane %v390, 2
        %v392 = vadd.f32 %v390, %v391
        %v393 = vrot.slane %v392, 1
        %v394 = vadd.f32 %v392, %v393
        %v395 = vsel %vm345, %v286, 0.0
        %v396 = vrot.slane %v395, 4
        %v397 = vadd.f32 %v395, %v396
        %v398 = vrot.slane %v397, 2
        %v399 = vadd.f32 %v397, %v398
        %v400 = vrot.slane %v399, 1
        %v401 = vadd.f32 %v399, %v400
        %v402 = vsel %vm345, %v247, 0.0
        %v403 = vrot.slane %v402, 4
        %v404 = vadd.f32 %v402, %v403
        %v405 = vrot.slane %v404, 2
        %v406 = vadd.f32 %v404, %v405
        %v407 = vrot.slane %v406, 1
        %v408 = vadd.f32 %v406, %v407
        %v409 = vsel %vm345, %v248, 0.0
        %v410 = vrot.slane %v409, 4
        %v411 = vadd.f32 %v409, %v410
        %v412 = vrot.slane %v411, 2
        %v413 = vadd.f32 %v411, %v412
        %v414 = vrot.slane %v413, 1
        %v415 = vadd.f32 %v413, %v414
        %v416 = vsel %vm345, %v249, 0.0
        %v417 = vrot.slane %v416, 4
        %v418 = vadd.f32 %v416, %v417
        %v419 = vrot.slane %v418, 2
        %v420 = vadd.f32 %v418, %v419
        %v421 = vrot.slane %v420, 1
        %v422 = vadd.f32 %v420, %v421
        %v423 = vsel %vm345, %v250, 0.0
        %v424 = vrot.slane %v423, 4
        %v425 = vadd.f32 %v423, %v424
        %v426 = vrot.slane %v425, 2
        %v427 = vadd.f32 %v425, %v426
        %v428 = vrot.slane %v427, 1
        %v429 = vadd.f32 %v427, %v428
        %v430 = vsel %vm345, %v335, 0.0
        %v431 = vrot.slane %v430, 4
        %v432 = vadd.f32 %v430, %v431
        %v433 = vrot.slane %v432, 2
        %v434 = vadd.f32 %v432, %v433
        %v435 = vrot.slane %v434, 1
        %v436 = vadd.f32 %v434, %v435
        %v437 = vsel %vm345, %v336, 0.0
        %v438 = vrot.slane %v437, 4
        %v439 = vadd.f32 %v437, %v438
        %v440 = vrot.slane %v439, 2
        %v441 = vadd.f32 %v439, %v440
        %v442 = vrot.slane %v441, 1
        %v443 = vadd.f32 %v441, %v442
        %v444 = vsel %vm345, %v337, 0.0
        %v445 = vrot.slane %v444, 4
        %v446 = vadd.f32 %v444, %v445
        %v447 = vrot.slane %v446, 2
        %v448 = vadd.f32 %v446, %v447
        %v449 = vrot.slane %v448, 1
        %v450 = vadd.f32 %v448, %v449
        %v451 = vsel %vm345, %v338, 0.0
        %v452 = vrot.slane %v451, 4
        %v453 = vadd.f32 %v451, %v452
        %v454 = vrot.slane %v453, 2
        %v455 = vadd.f32 %v453, %v454
        %v456 = vrot.slane %v455, 1
        %v457 = vadd.f32 %v455, %v456
        %vm462 = vcmask 1041409
        %v463 = vsel %vm462, %v359, %v352
        %vm464 = vcmask 1042434
        %v465 = vsel %vm464, %v366, %v463
        %vm466 = vcmask 1043459
        %v467 = vsel %vm466, %v373, %v465
        %vm473 = vcmask 1045509
        %v474 = vsel %vm473, %v387, %v380
        %vm475 = vcmask 1046534
        %v476 = vsel %vm475, %v394, %v474
        %vm477 = vcmask 1047559
        %v478 = vsel %vm477, %v401, %v476
        %v484 = vsel %vm462, %v415, %v408
        %v485 = vsel %vm464, %v422, %v484
        %v486 = vsel %vm466, %v429, %v485
        %v492 = vsel %vm473, %v443, %v436
        %v493 = vsel %vm475, %v450, %v492
        %v494 = vsel %vm477, %v457, %v493
        %vm496 = vcmask 1043456
        %v497 = vsel %vm496, %v467, %v478
        %v498 = vsel %vm496, %v486, %v494
        %v499 = vadd.f32 %v339, %v497
        %v500 = vadd.f32 %v340, %v498
        %501 = vst [vmem:[%s234] sm:$0xff] %v499
        %502 = vst [vmem:[%s234 + $0x8] sm:$0xff] %v500
        %s503 = sand.u32 %s111, 1
        %s504 = scalar_lea.sflag [#allocation4], %s503
        %s505 = sand.u32 %s111, 1
        %s506 = smul.addr %s505, 16
        %s507 = scalar_lea.vmem [#allocation7], %s506
        // Predicated region
        $region41: #{tpu_custom_call.1} parent=27 // pred_check
          %p508 = pneg %p121
        $region42: #{tpu_custom_call.1} parent=27 // pred_check_branch
          %510 = sbr.rel (%p508) target = $region44
        $region43: #{tpu_custom_call.1} parent=27 // pred_region
          %s512 = ssub.s32 256, 256
          %513 = vsyncadd %s504, %s512
          %s514 = smul.addr %s28, 2
          %s515 = smul.addr %s27, 2
          %s516 = sadd.s32 %s514, %s515
          %s517 = smul.addr %s516, 128
          %s518 = scalar_lea.hbm %s2, %s517
          %s519 = sshll.u32 %s507, 4
          %s520 = int_to_ptr.vmem [resolvable:$true] %s519
          %525 = dma.vmem_to_hbm [thread:$0]  %s520, 256, %s518, %s504, 128, 128, 8
        $region44: #{tpu_custom_call.1} parent=27 // pred_fallthru
          _
      $region28: #{tpu_custom_call.1} parent=5 // pred_fallthru
        _
      %p526 = scmp.le.s32.totalorder 2, %s17
      // Predicated region
      $region45: #{tpu_custom_call.1} parent=5 // pred_check
        %p527 = pneg %p526
      $region46: #{tpu_custom_call.1} parent=5 // pred_check_branch
        %529 = sbr.rel (%p527) target = $region48
      $region47: #{tpu_custom_call.1} parent=5 // pred_region
        %s530 = ssub.s32 %s17, 2
        // Predicated region
        $region49: #{tpu_custom_call.1} parent=47 // pred_check
          %p531 = pneg %p127
        $region50: #{tpu_custom_call.1} parent=47 // pred_check_branch
          %533 = sbr.rel (%p531) target = $region52
        $region51: #{tpu_custom_call.1} parent=47 // pred_region
          %s534 = sand.u32 %s112, 1
          %s535 = scalar_lea.sflag [#allocation4], %s534
          %s536 = sand.u32 %s112, 1
          %s537 = smul.addr %s536, 16
          %s538 = scalar_lea.vmem [#allocation7], %s537
          %539 = dma.done %s535, 256
        $region52: #{tpu_custom_call.1} parent=47 // pred_fallthru
          _
      $region48: #{tpu_custom_call.1} parent=5 // pred_fallthru
        _
    $region6: #{tpu_custom_call.1} parent=1 // loop_footer
      %s21 = sadd.s32 1, %s17
    $region7: #{tpu_custom_call.1} parent=1 // loop_footer_branch
      %16 = sbr.rel target = $region3
    $region8: #{tpu_custom_call.1} parent=1 // loop_exit
      _
    %540 = vsyncpa [#allocation3], 1
    %s541 = scalar_lea.sflag [#allocation3], 1
    %542 = vsyncpa %s541, 1
    %543 = vsyncpa [#allocation6], 1
    %s544 = scalar_lea.sflag [#allocation6], 1
    %545 = vsyncpa %s544, 1
    %546 = vsyncpa [#allocation4], 1
    %s547 = scalar_lea.sflag [#allocation4], 1
    %548 = vsyncpa %s547, 1

</llo_original>
